<compile_context>
chip_gen: v7x
topology: tpu7x:2x2x1
jax: 0.10.0
libtpu: 0.0.40
codegen_flags: <defaults>
</compile_context>

<pallas_src>
import math

import jax
import jax.numpy as jnp
from jax.experimental import pallas as pl
from jax.experimental.pallas import tpu as pltpu


def _round_up(v, m):
    return ((v + m - 1) // m) * m


def _pad_n(n):
    """Pad node count: 128-align when the extra adj bytes are small (<~15%),
    otherwise keep 8-alignment (tiny graphs)."""
    n8 = _round_up(n, 8)
    n128 = _round_up(n, 128)
    return n128 if n128 * n128 <= int(1.15 * n8 * n8) else n8


def _vmem_budget_bytes():
    """Return (resident budget, physical VMEM capacity) for this TPU generation."""
    try:
        cap = int(pltpu.get_tpu_info().vmem_capacity_bytes)
    except Exception:  # interpret mode / unknown chip
        cap = 64 << 20
    if cap >= (128 << 20):                      # v5e / v6e: exploit the big VMEM
        return 96 << 20, cap
    return max(cap - (16 << 20), 32 << 20), cap  # v7x: leave compiler headroom


# ---------------------------------------------------------------------------
# Tiling plans
# ---------------------------------------------------------------------------
def _plan_fused(B, N, Fin, Fout_p, adj_bytes, sup_bytes, budget):
    """Fused plan: whole support (x @ W) kept resident per batch block."""
    n_p = _pad_n(N)
    fin_l = _round_up(max(Fin, 1), 128)          # lane-padded Fin (VMEM estimate)

    def resident(bt, tm):
        return (
            2 * bt * tm * max(n_p, 128) * adj_bytes     # adj tiles (double buffered)
            + 2 * bt * tm * Fout_p * 4                  # out tiles (f32, double buffered)
            + 2 * bt * n_p * fin_l * 4                  # x block   (f32, double buffered)
            + 2 * _round_up(Fin, 8) * Fout_p * 4        # weight
            + 2 * 8 * Fout_p * 4                        # bias
            + bt * max(n_p, 16) * Fout_p * sup_bytes    # persistent support scratch
        )

    cands = [n_p] + [t for t in (1024, 512, 256, 128) if t < n_p and n_p % t == 0]
    for tm in cands:
        if tm == n_p:
            # small-graph fold: aim for ~2 MiB of adj moved per grid step
            bt = max(1, min(B, (2 << 20) // max(n_p * n_p * adj_bytes, 1)))
        else:
            bt = 1
        while bt > 1 and resident(bt, tm) > budget:
            bt = max(1, bt // 2)
        est = resident(bt, tm)
        if est <= budget:
            return dict(bt=bt, b_p=_round_up(B, bt), tm=tm, n_p=n_p, est=est)
    return None  # does not fit -> streamed path


def _plan_streamed(B, N, Fout_p, adj_bytes, sup_bytes, budget, max_tile=None):
    """Streamed plan: support is a pipelined input; N contraction is tiled."""
    n_p = _pad_n(N)
    cands = [n_p] + [t for t in (1024, 512, 256, 128) if t < n_p and n_p % t == 0]
    if max_tile:
        filt = [t for t in cands if t <= max_tile]
        if filt:
            cands = filt

    def resident(bt, t):
        return (
            2 * bt * t * max(t, 128) * adj_bytes        # adj tiles
            + 2 * bt * max(t, 16) * Fout_p * sup_bytes  # support tiles
            + 2 * bt * t * Fout_p * 4                   # out tiles (f32)
            + 2 * 8 * Fout_p * 4                        # bias
            + bt * t * Fout_p * 4                       # f32 accumulator scratch
        )

    best = None
    for t in cands:
        if t == n_p:
            bt = max(1, min(B, (2 << 20) // max(t * n_p * adj_bytes, 1)))
        else:
            bt = 1
        while bt > 1 and resident(bt, t) > budget:
            bt = max(1, bt // 2)
        est = resident(bt, t)
        if est <= budget:
            return dict(bt=bt, b_p=_round_up(B, bt), t=t, n_p=n_p, est=est)
        best = dict(bt=1, b_p=B, t=t, n_p=n_p, est=resident(1, t))
    return best  # smallest-tile best effort


# ---------------------------------------------------------------------------
# Kernels
# ---------------------------------------------------------------------------
def _gcn_fused_kernel(x_ref, adj_ref, w_ref, b_ref, o_ref, support_ref):
    # grid = (batch_block, row_tile).  support = x @ W is computed ONCE per
    # batch block (row_tile == 0) into a persistent VMEM scratch (bf16 or f32)
    # and reused by every adjacency row tile.
    @pl.when(pl.program_id(1) == 0)
    def _():
        bt, n_p, fin = x_ref.shape
        f_p = w_ref.shape[1]
        x2d = x_ref[...].reshape(bt * n_p, fin)          # layout-trivial (n_p % 8 == 0)
        s2d = jnp.dot(x2d, w_ref[...], preferred_element_type=jnp.float32)
        support_ref[...] = s2d.reshape(bt, n_p, f_p).astype(support_ref.dtype)

    # out_tile = adj_tile @ support  (batched matmul on the MXU, f32 acc)
    out = jnp.einsum("bmn,bnf->bmf", adj_ref[...], support_ref[...],
                     preferred_element_type=jnp.float32)
    o_ref[...] = (out + b_ref[...]).astype(o_ref.dtype)


def _gcn_streamed_kernel(adj_ref, sup_ref, b_ref, o_ref, acc_ref):
    # grid = (batch_block, row_tile, k_tile).  support is a pipelined input;
    # the N contraction is tiled and accumulated in f32 so VMEM is bounded
    # independently of N * Fout.
    k = pl.program_id(2)

    @pl.when(k == 0)
    def _():
        acc_ref[...] = jnp.zeros_like(acc_ref)

    acc_ref[...] += jnp.einsum("bmn,bnf->bmf", adj_ref[...], sup_ref[...],
                               preferred_element_type=jnp.float32)

    @pl.when(k == pl.num_programs(2) - 1)
    def _():
        o_ref[...] = (acc_ref[...] + b_ref[...]).astype(o_ref.dtype)


# ---------------------------------------------------------------------------
# Wrapper
# ---------------------------------------------------------------------------
def graph_convolution(x, adj, weight, bias=None, *, use_bf16=True,
                      force_streamed=False, _max_tile=None):
    """Pallas GCN layer.

    x:      (B, N, Fin)  float32
    adj:    (B, N, N)    float32
    weight: (Fin, Fout)  float32
    bias:   (Fout,) float32 or None
    use_bf16: keep adj / support in bfloat16 (f32 MXU accumulation).  Set
              False for bit-faithful f32 semantics (matches PyTorch numerics).
    returns (B, N, Fout) float32
    """
    B, N, Fin = x.shape
    Fout = weight.shape[1]
    assert adj.shape == (B, N, N)
    assert weight.shape == (Fin, Fout)

    cdtype = jnp.bfloat16 if use_bf16 else jnp.float32
    c_bytes = jnp.dtype(cdtype).itemsize
    Fout_p = _round_up(Fout, 128)                # lane-dense output stores
    budget, cap = _vmem_budget_bytes()

    w_p = jnp.pad(weight.astype(jnp.float32), ((0, 0), (0, Fout_p - Fout)))
    if bias is None:
        bias2d = jnp.zeros((1, Fout_p), jnp.float32)
    else:
        bias2d = jnp.pad(bias.astype(jnp.float32), (0, Fout_p - Fout)).reshape(1, Fout_p)

    cost = pl.CostEstimate(
        flops=2 * B * N * Fin * Fout + 2 * B * N * N * Fout,
        transcendentals=0,
        bytes_accessed=(4 * B * N * Fin + c_bytes * B * N * N
                        + 4 * Fin * Fout + 4 * Fout + 4 * B * N * Fout),
    )

    plan = None if force_streamed else _plan_fused(
        B, N, Fin, Fout_p, c_bytes, c_bytes, budget)

    if plan is not None:
        # ---- fused path: in-kernel support, persistent scratch -------------
        BT, B_p, TM, N_p, est = plan["bt"], plan["b_p"], plan["tm"], plan["n_p"], plan["est"]
        x_p = jnp.pad(x.astype(jnp.float32), ((0, B_p - B), (0, N_p - N), (0, 0)))
        adj_p = jnp.pad(adj, ((0, B_p - B), (0, N_p - N), (0, N_p - N))).astype(cdtype)
        vmem_limit = int(min(max(est + (8 << 20), 32 << 20), cap - (4 << 20)))

        out_p = pl.pallas_call(
            _gcn_fused_kernel,
            out_shape=jax.ShapeDtypeStruct((B_p, N_p, Fout_p), jnp.float32),
            grid_spec=pltpu.PrefetchScalarGridSpec(
                num_scalar_prefetch=0,
                grid=(B_p // BT, N_p // TM),
                in_specs=[
                    pl.BlockSpec((BT, N_p, Fin), lambda b, t: (b, 0, 0)),    # x (full rows)
                    pl.BlockSpec((BT, TM, N_p), lambda b, t: (b, t, 0)),     # adj row tile
                    pl.BlockSpec((Fin, Fout_p), lambda b, t: (0, 0)),        # weight
                    pl.BlockSpec((1, Fout_p), lambda b, t: (0, 0)),          # bias
                ],
                out_specs=pl.BlockSpec((BT, TM, Fout_p), lambda b, t: (b, t, 0)),
                scratch_shapes=[pltpu.VMEM((BT, N_p, Fout_p), cdtype)],
            ),
            compiler_params=pltpu.CompilerParams(
                # row-tile axis must stay "arbitrary": the support scratch is
                # initialised at row_tile == 0 and reused by later row tiles.
                dimension_semantics=("parallel", "arbitrary"),
                vmem_limit_bytes=vmem_limit,
            ),
            cost_estimate=cost,
        )(x_p, adj_p, w_p, bias2d)
    else:
        # ---- streamed path: contraction-tiled adj @ support ----------------
        plan = _plan_streamed(B, N, Fout_p, c_bytes, c_bytes, budget, _max_tile)
        BT, B_p, T, N_p, est = plan["bt"], plan["b_p"], plan["t"], plan["n_p"], plan["est"]
        x_p = jnp.pad(x.astype(jnp.float32), ((0, B_p - B), (0, N_p - N), (0, 0)))
        adj_p = jnp.pad(adj, ((0, B_p - B), (0, N_p - N), (0, N_p - N))).astype(cdtype)
        # support = x @ W is tiny next to the adj matmul; precompute with XLA
        # and stream it through the kernel tiled over the contraction.
        support = jnp.einsum("bnl,le->bne", x_p, w_p,
                             preferred_element_type=jnp.float32).astype(cdtype)
        vmem_limit = int(min(max(est + (8 << 20), 32 << 20), cap - (4 << 20)))

        out_p = pl.pallas_call(
            _gcn_streamed_kernel,
            out_shape=jax.ShapeDtypeStruct((B_p, N_p, Fout_p), jnp.float32),
            grid_spec=pltpu.PrefetchScalarGridSpec(
                num_scalar_prefetch=0,
                grid=(B_p // BT, N_p // T, N_p // T),
                in_specs=[
                    pl.BlockSpec((BT, T, T), lambda b, i, k: (b, i, k)),       # adj tile
                    pl.BlockSpec((BT, T, Fout_p), lambda b, i, k: (b, k, 0)),  # support tile
                    pl.BlockSpec((1, Fout_p), lambda b, i, k: (0, 0)),         # bias
                ],
                out_specs=pl.BlockSpec((BT, T, Fout_p), lambda b, i, k: (b, i, 0)),
                scratch_shapes=[pltpu.VMEM((BT, T, Fout_p), jnp.float32)],
            ),
            compiler_params=pltpu.CompilerParams(
                # row axis is parallel too -> both v7x TensorCores busy even at B == 1
                dimension_semantics=("parallel", "parallel", "arbitrary"),
                vmem_limit_bytes=vmem_limit,
            ),
            cost_estimate=cost,
        )(adj_p, support, bias2d)

    return out_p[:B, :N, :Fout]


def _reference(x, adj, weight, bias):
    support = jnp.einsum("bsl,le->bse", x, weight)
    out = jnp.einsum("bsl,ble->bse", adj, support)
    return out + bias if bias is not None else out


if __name__ == "__main__":
    key = jax.random.PRNGKey(0)
    kx, ka, kw, kb, kx2, ka2, kw2, kb2 = jax.random.split(key, 8)

    # ---- small demo matching the PyTorch module: B=2 graphs, N=8 nodes, 16->32
    B, N, Fin, Fout = 2, 8, 16, 32
    stdv = 1.0 / math.sqrt(Fout)
    x = jax.random.normal(kx, (B, N, Fin), dtype=jnp.float32)
    adj = jax.random.uniform(ka, (B, N, N), dtype=jnp.float32)
    weight = jax.random.uniform(kw, (Fin, Fout), dtype=jnp.float32,
                                minval=-stdv, maxval=stdv)
    bias = jax.random.uniform(kb, (Fout,), dtype=jnp.float32,
                              minval=-stdv, maxval=stdv)
    ref = _reference(x, adj, weight, bias)

    # 1) default path: bf16 adj / support, f32 accumulation (fused kernel).
    out = jax.block_until_ready(graph_convolution(x, adj, weight, bias))
    assert out.shape == (B, N, Fout)
    assert jnp.allclose(out, ref, atol=3e-2, rtol=3e-2)

    # 2) exact f32 path (matches PyTorch module numerics).
    out_f32 = jax.block_until_ready(
        graph_convolution(x, adj, weight, bias, use_bf16=False))
    assert jnp.allclose(out_f32, ref, atol=1e-5, rtol=1e-5)

    # 3) bias=None path.
    out_nb = jax.block_until_ready(
        graph_convolution(x, adj, weight, None, use_bf16=False))
    assert jnp.allclose(out_nb, _reference(x, adj, weight, None),
                        atol=1e-5, rtol=1e-5)

    # 4) streamed (contraction-tiled) fallback path, forced at a mid-size shape
    #    so the k-axis accumulation and Fout padding are exercised.
    B2, N2, Fin2, Fout2 = 2, 256, 48, 96
    stdv2 = 1.0 / math.sqrt(Fout2)
    x2 = jax.random.normal(kx2, (B2, N2, Fin2), dtype=jnp.float32)
    adj2 = jax.random.uniform(ka2, (B2, N2, N2), dtype=jnp.float32)
    w2 = jax.random.uniform(kw2, (Fin2, Fout2), dtype=jnp.float32,
                            minval=-stdv2, maxval=stdv2)
    b2 = jax.random.uniform(kb2, (Fout2,), dtype=jnp.float32,
                            minval=-stdv2, maxval=stdv2)
    ref2 = _reference(x2, adj2, w2, b2)

    out2 = jax.block_until_ready(
        graph_convolution(x2, adj2, w2, b2, force_streamed=True, _max_tile=128))
    assert out2.shape == (B2, N2, Fout2)
    assert jnp.allclose(out2, ref2, atol=1e-1, rtol=5e-2)

    out2_f32 = jax.block_until_ready(
        graph_convolution(x2, adj2, w2, b2, use_bf16=False,
                          force_streamed=True, _max_tile=128))
    assert jnp.allclose(out2_f32, ref2, atol=1e-3, rtol=1e-3)

    print("KERNEL_OK")
</pallas_src>

<mosaic_0001>
module attributes {stable_mosaic.version = 11 : i64} {
  func.func @_gcn_fused_kernel(%arg0: i32, %arg1: i32, %arg2: memref<2x8x16xf32, #tpu.memory_space<vmem>>, %arg3: memref<2x8x8xbf16, #tpu.memory_space<vmem>>, %arg4: memref<16x128xf32, #tpu.memory_space<vmem>>, %arg5: memref<1x128xf32, #tpu.memory_space<vmem>>, %arg6: memref<2x8x128xf32, #tpu.memory_space<vmem>>, %arg7: memref<2x8x128xbf16, #tpu.memory_space<vmem>>) attributes {dimension_semantics = [#tpu.dimension_semantics<parallel>, #tpu.dimension_semantics<arbitrary>], iteration_bounds = array<i64: 1, 1>, scalar_prefetch = 0 : i64, scratch_operands = 1 : i64, tpu.core_type = #tpu.core_type<tc>, window_params = [{transform_indices = @transform_0, window_bounds = array<i64: 2, 8, 16>}, {transform_indices = @transform_1, window_bounds = array<i64: 2, 8, 8>}, {pipeline_mode = #tpu.pipeline_mode<synchronous>, transform_indices = @transform_2, window_bounds = array<i64: 16, 128>}, {pipeline_mode = #tpu.pipeline_mode<synchronous>, transform_indices = @transform_3, window_bounds = array<i64: 1, 128>}, {transform_indices = @transform_4, window_bounds = array<i64: 2, 8, 128>}]} {
    %c0_i32 = arith.constant 0 : i32
    %0 = arith.cmpi eq, %arg1, %c0_i32 : i32
    %1 = arith.extui %0 : i1 to i32
    %c0_i32_0 = arith.constant 0 : i32
    %2 = arith.cmpi ne, %1, %c0_i32_0 : i32
    scf.if %2 {
      %c0_11 = arith.constant 0 : index
      %c0_12 = arith.constant 0 : index
      %c0_13 = arith.constant 0 : index
      %11 = vector.load %arg2[%c0_11, %c0_12, %c0_13] : memref<2x8x16xf32, #tpu.memory_space<vmem>>, vector<2x8x16xf32>
      %12 = vector.shape_cast %11 : vector<2x8x16xf32> to vector<16x16xf32>
      %c0_14 = arith.constant 0 : index
      %c0_15 = arith.constant 0 : index
      %13 = vector.load %arg4[%c0_14, %c0_15] : memref<16x128xf32, #tpu.memory_space<vmem>>, vector<16x128xf32>
      %cst_16 = arith.constant dense<0.000000e+00> : vector<16x128xf32>
      %14 = tpu.matmul %12, %13, %cst_16 {dimension_numbers = #tpu.dot_dimension_numbers<[1], [0], [0], [1], [0, 0, 1, 1], [], []>} : vector<16x16xf32>, vector<16x128xf32>, vector<16x128xf32> -> vector<16x128xf32>
      %15 = vector.shape_cast %14 : vector<16x128xf32> to vector<2x8x128xf32>
      %16 = arith.truncf %15 : vector<2x8x128xf32> to vector<2x8x128xbf16>
      %c0_17 = arith.constant 0 : index
      %c0_18 = arith.constant 0 : index
      %c0_19 = arith.constant 0 : index
      %17 = vector.load %arg7[%c0_17, %c0_18, %c0_19] : memref<2x8x128xbf16, #tpu.memory_space<vmem>>, vector<2x8x128xbf16>
      tpu.vector_store %arg7[%c0_17, %c0_18, %c0_19], %16 {strides = array<i32>} : memref<2x8x128xbf16, #tpu.memory_space<vmem>>, vector<2x8x128xbf16>,
    } else {
    }
    %c0 = arith.constant 0 : index
    %c0_1 = arith.constant 0 : index
    %c0_2 = arith.constant 0 : index
    %3 = vector.load %arg3[%c0, %c0_1, %c0_2] : memref<2x8x8xbf16, #tpu.memory_space<vmem>>, vector<2x8x8xbf16>
    %c0_3 = arith.constant 0 : index
    %c0_4 = arith.constant 0 : index
    %c0_5 = arith.constant 0 : index
    %4 = vector.load %arg7[%c0_3, %c0_4, %c0_5] : memref<2x8x128xbf16, #tpu.memory_space<vmem>>, vector<2x8x128xbf16>
    "tpu.trace_start"() <{level = 10 : i32, message = "bmn,bnf->bmf"}> : () -> ()
    %cst = arith.constant dense<0.000000e+00> : vector<2x8x128xf32>
    %5 = tpu.matmul %3, %4, %cst {dimension_numbers = #tpu.dot_dimension_numbers<[2], [1], [1], [2], [0, 0, 0, 1, 1, 2], [0], [0]>} : vector<2x8x8xbf16>, vector<2x8x128xbf16>, vector<2x8x128xf32> -> vector<2x8x128xf32>
    "tpu.trace_stop"() : () -> ()
    %c0_6 = arith.constant 0 : index
    %c0_7 = arith.constant 0 : index
    %6 = vector.load %arg5[%c0_6, %c0_7] : memref<1x128xf32, #tpu.memory_space<vmem>>, vector<1x128xf32>
    %7 = vector.shape_cast %6 : vector<1x128xf32> to vector<1x1x128xf32>
    %8 = vector.broadcast %7 : vector<1x1x128xf32> to vector<2x8x128xf32>
    %9 = arith.addf %5, %8 : vector<2x8x128xf32>
    %c0_8 = arith.constant 0 : index
    %c0_9 = arith.constant 0 : index
    %c0_10 = arith.constant 0 : index
    %10 = vector.load %arg6[%c0_8, %c0_9, %c0_10] : memref<2x8x128xf32, #tpu.memory_space<vmem>>, vector<2x8x128xf32>
    tpu.vector_store %arg6[%c0_8, %c0_9, %c0_10], %9 {strides = array<i32>} : memref<2x8x128xf32, #tpu.memory_space<vmem>>, vector<2x8x128xf32>,
    return
  }
  func.func @transform_0(%arg0: i32, %arg1: i32) -> (i32, i32, i32) {
    %c0_i32 = arith.constant 0 : i32
    %c0_i32_0 = arith.constant 0 : i32
    %c0_i32_1 = arith.constant 0 : i32
    return %arg0, %c0_i32, %c0_i32_0 : i32, i32, i32
  }
  func.func @transform_1(%arg0: i32, %arg1: i32) -> (i32, i32, i32) {
    %c0_i32 = arith.constant 0 : i32
    %c0_i32_0 = arith.constant 0 : i32
    return %arg0, %arg1, %c0_i32 : i32, i32, i32
  }
  func.func @transform_2(%arg0: i32, %arg1: i32) -> (i32, i32) {
    %c0_i32 = arith.constant 0 : i32
    %c0_i32_0 = arith.constant 0 : i32
    %c0_i32_1 = arith.constant 0 : i32
    return %c0_i32, %c0_i32_0 : i32, i32
  }
  func.func @transform_3(%arg0: i32, %arg1: i32) -> (i32, i32) {
    %c0_i32 = arith.constant 0 : i32
    %c0_i32_0 = arith.constant 0 : i32
    %c0_i32_1 = arith.constant 0 : i32
    return %c0_i32, %c0_i32_0 : i32, i32
  }
  func.func @transform_4(%arg0: i32, %arg1: i32) -> (i32, i32, i32) {
    %c0_i32 = arith.constant 0 : i32
    %c0_i32_0 = arith.constant 0 : i32
    return %arg0, %arg1, %c0_i32 : i32, i32, i32
  }
}

</mosaic_0001>

<llo_original>
// kernel: tpu_custom_call.1
$region0: #{tpu_custom_call.1}
  #allocation0 [shape = 'u32[]', space=smem, size = 0x4, offset = 0x4, fixed_abs, tag = 'smem constant byte address 0x4 - core index']
  #allocation1 [shape = 'u32[144,128]{1,0:T(1,128)}', space=vmem, size = 0x12000, scoped, tag = 'internal scratch']
  #allocation2 [shape = 'bf16[2,8,128]{2,1,0:T(8,128)(2,1)}', space=vmem, size = 0x1000, scoped, tag = 'scratch operand']
  %s0 = inlined_call_operand.hbm [shape: f32[2,8,16], index: 0, kind: input, shape index: {}]
  %s1 = inlined_call_operand.hbm [shape: bf16[2,8,8], index: 1, kind: input, shape index: {}]
  %s2 = inlined_call_operand.hbm [shape: f32[16,128], index: 2, kind: input, shape index: {}]
  %s3 = inlined_call_operand.vmem [shape: f32[1,128], index: 3, kind: input, shape index: {}]
  %s4 = inlined_call_operand.hbm [shape: f32[2,8,128], index: 4, kind: output, shape index: {}]
  %s5 = sld [smem:[#allocation0]]
  $region42: #{tpu_custom_call.1} parent=0
    _
  %s7 = ssub.s32 1, %s5
  %s8 = scalar_select 0, %s7, %s5
  $region1: #{tpu_custom_call.1} parent=0
    #allocation3 [shape = 'u8[8192]{0}', space=vmem, size = 0x2000, scoped, tag = 'input window, operand 0, single buffered']
    #allocation4 [shape = 's32[1]{0}', space=sflag, size = 0x4, scoped, tag = 'scoped memory for tpu_custom_call.1']
    #allocation5 [shape = 's32[1]{0}', space=sflag, size = 0x4, scoped, tag = 'scoped memory for tpu_custom_call.1']
    #allocation6 [shape = 'u8[4096]{0}', space=vmem, size = 0x1000, scoped, tag = 'input window, operand 1, single buffered']
    #allocation7 [shape = 's32[1]{0}', space=sflag, size = 0x4, scoped, tag = 'scoped memory for tpu_custom_call.1']
    #allocation8 [shape = 'u8[8192]{0}', space=vmem, size = 0x2000, scoped, tag = 'input window, operand 2, single buffered']
    #allocation9 [shape = 'u8[8192]{0}', space=vmem, size = 0x2000, scoped, tag = 'output window, operand 0, single buffered']
    %9 = vsyncpa [#allocation4], 0
    %10 = vsyncpa [#allocation7], 0
    %11 = vsyncpa [#allocation5], 0
    // Predicated region
    $region2: #{tpu_custom_call.1} parent=1 // pred_check
      _
    $region3: #{tpu_custom_call.1} parent=1 // pred_check_branch
      %13 = sbr.rel (0) target = $region5
    $region4: #{tpu_custom_call.1} parent=1 // pred_region
      %s15 = ssub.s32 256, 256
      %16 = vsyncadd [#allocation4], %s15
      %s17 = sshll.u32 [#allocation3], 4
      %s18 = int_to_ptr.vmem [resolvable:$true] %s17
      %23 = dma.hbm_to_vmem [thread:$0]  %s0, 256, %s18, [#allocation4], 128, 128, 8
    $region5: #{tpu_custom_call.1} parent=1 // pred_fallthru
      _
    // Predicated region
    $region6: #{tpu_custom_call.1} parent=1 // pred_check
      _
    $region7: #{tpu_custom_call.1} parent=1 // pred_check_branch
      %25 = sbr.rel (0) target = $region9
    $region8: #{tpu_custom_call.1} parent=1 // pred_region
      %s27 = ssub.s32 128, 128
      %28 = vsyncadd [#allocation7], %s27
      %s29 = sshll.u32 [#allocation6], 4
      %s30 = int_to_ptr.vmem [resolvable:$true] %s29
      %35 = dma.hbm_to_vmem [thread:$0]  %s1, 128, %s30, [#allocation7], 64, 64, 4
    $region9: #{tpu_custom_call.1} parent=1 // pred_fallthru
      _
    // Predicated region
    $region10: #{tpu_custom_call.1} parent=1 // pred_check
      _
    $region11: #{tpu_custom_call.1} parent=1 // pred_check_branch
      %37 = sbr.rel (0) target = $region13
    $region12: #{tpu_custom_call.1} parent=1 // pred_region
      %s39 = ssub.s32 256, 256
      %40 = vsyncadd [#allocation7], %s39
      %s41 = sshll.u32 [#allocation8], 4
      %s42 = int_to_ptr.vmem [resolvable:$true] %s41
      %47 = dma.hbm_to_vmem [thread:$0]  %s2, 256, %s42, [#allocation7], 128, 128, 8
    $region13: #{tpu_custom_call.1} parent=1 // pred_fallthru
      _
    // Predicated region
    $region14: #{tpu_custom_call.1} parent=1 // pred_check
      _
    $region15: #{tpu_custom_call.1} parent=1 // pred_check_branch
      %49 = sbr.rel (0) target = $region17
    $region16: #{tpu_custom_call.1} parent=1 // pred_region
      _
    $region17: #{tpu_custom_call.1} parent=1 // pred_fallthru
      _
    // Predicated region
    $region18: #{tpu_custom_call.1} parent=1 // pred_check
      _
    $region19: #{tpu_custom_call.1} parent=1 // pred_check_branch
      %51 = sbr.rel (0) target = $region21
    $region20: #{tpu_custom_call.1} parent=1 // pred_region
      %52 = dma.done [#allocation4], 256
    $region21: #{tpu_custom_call.1} parent=1 // pred_fallthru
      _
    // Predicated region
    $region22: #{tpu_custom_call.1} parent=1 // pred_check
      _
    $region23: #{tpu_custom_call.1} parent=1 // pred_check_branch
      %54 = sbr.rel (0) target = $region25
    $region24: #{tpu_custom_call.1} parent=1 // pred_region
      %55 = dma.done [#allocation7], 128
    $region25: #{tpu_custom_call.1} parent=1 // pred_fallthru
      _
    // Predicated region
    $region26: #{tpu_custom_call.1} parent=1 // pred_check
      _
    $region27: #{tpu_custom_call.1} parent=1 // pred_check_branch
      %57 = sbr.rel (0) target = $region29
    $region28: #{tpu_custom_call.1} parent=1 // pred_region
      %58 = dma.done [#allocation7], 256
    $region29: #{tpu_custom_call.1} parent=1 // pred_fallthru
      _
    %p60 = scmp.eq.s32.totalorder 0, 0
    // Predicated region
    $region30: #{tpu_custom_call.1} parent=1 // pred_check
      %p61 = pneg %p60
    $region31: #{tpu_custom_call.1} parent=1 // pred_check_branch
      %63 = sbr.rel (%p61) target = $region33
    $region32: #{tpu_custom_call.1} parent=1 // pred_region
      %v64 = vld [vmem:[#allocation3] sm:$0xff]
      %v65 = vld [vmem:[#allocation3 + $0x8] sm:$0xff]
      %v66 = vld [vmem:[#allocation8] sm:$0xff]
      %v67 = vld [vmem:[#allocation8 + $0x8] sm:$0xff]
      %vm68 = vcmask 130048
      %v70 = vsel %vm68, %v64, 0
      %v73 = vsel %vm68, %v65, 0
      %75 = vmatprep.subr.mxu0 0.0
      %76 = vmatpush1.msra.mxu0 %v66
      %77 = vmatprep.subr.mxu0 0.0
      %78 = vmatpush1.msra.mxu0 %v67
      %79 = vmatprep.subr.mxu0 0.0
      %80 = vmatpush1.msra.mxu0 0.0
      %81 = vmatprep.subr.mxu0 0.0
      %82 = vmatpush1.msra.mxu0 0.0
      %83 = vmatprep.subr.mxu0 0.0
      %84 = vmatpush1.msra.mxu0 0.0
      %85 = vmatprep.subr.mxu0 0.0
      %86 = vmatpush1.msra.mxu0 0.0
      %87 = vmatprep.subr.mxu0 0.0
      %88 = vmatpush1.msra.mxu0 0.0
      %89 = vmatprep.subr.mxu0 0.0
      %90 = vmatpush1.msra.mxu0 0.0
      %91 = vmatprep.subr.mxu0 0.0
      %92 = vmatpush1.msra.mxu0 0.0
      %93 = vmatprep.subr.mxu0 0.0
      %94 = vmatpush1.msra.mxu0 0.0
      %95 = vmatprep.subr.mxu0 0.0
      %96 = vmatpush1.msra.mxu0 0.0
      %97 = vmatprep.subr.mxu0 0.0
      %98 = vmatpush1.msra.mxu0 0.0
      %99 = vmatprep.subr.mxu0 0.0
      %100 = vmatpush1.msra.mxu0 0.0
      %101 = vmatprep.subr.mxu0 0.0
      %102 = vmatpush1.msra.mxu0 0.0
      %103 = vmatprep.subr.mxu0 0.0
      %104 = vmatpush1.msra.mxu0 0.0
      %105 = vmatprep.subr.mxu0 0.0
      %106 = vmatpush1.msra.mxu0 0.0
      %107 = vmatprep.subr.mxu0 0.0
      %108 = vmatpush1.msra.mxu0 0.0
      %109 = vmatprep.subr.mxu0 0.0
      %110 = vmatpush1.msra.mxu0 0.0
      %111 = vmatprep.subr.mxu0 0.0
      %112 = vmatpush1.msra.mxu0 0.0
      %113 = vmatprep.subr.mxu0 0.0
      %114 = vmatpush1.msra.mxu0 0.0
      %115 = vmatprep.subr.mxu0 0.0
      %116 = vmatpush1.msra.mxu0 0.0
      %117 = vmatprep.subr.mxu0 0.0
      %118 = vmatpush1.msra.mxu0 0.0
      %119 = vmatprep.subr.mxu0 0.0
      %120 = vmatpush1.msra.mxu0 0.0
      %121 = vmatprep.subr.mxu0 0.0
      %122 = vmatpush1.msra.mxu0 0.0
      %123 = vmatprep.subr.mxu0 0.0
      %124 = vmatpush1.msra.mxu0 0.0
      %125 = vmatprep.subr.mxu0 0.0
      %126 = vmatpush1.msra.mxu0 0.0
      %127 = vmatprep.subr.mxu0 0.0
      %128 = vmatpush1.msra.mxu0 0.0
      %129 = vmatprep.subr.mxu0 0.0
      %130 = vmatpush1.msra.mxu0 0.0
      %131 = vmatprep.subr.mxu0 0.0
      %132 = vmatpush1.msra.mxu0 0.0
      %133 = vmatprep.subr.mxu0 0.0
      %134 = vmatpush1.msra.mxu0 0.0
      %135 = vmatprep.subr.mxu0 0.0
      %136 = vmatpush1.msra.mxu0 0.0
      %137 = vmatprep.subr.mxu0 0.0
      %138 = vmatpush1.msra.mxu0 0.0
      %139 = vmatprep.mubr.f32.mxu0 0.0
      %140 = vmatmul.mubr.f32.gmra.mrb[0].mxu0 %v70
      %v141 = vpop.f32.mrb[0].mxu0
      %v142 = vadd.f32 0.0, %v141
      %v143 = vpop.f32.mrb[0].mxu0
      %144 = vmatprep.mubr.f32.mxu0 0.0
      %145 = vmatmul.mubr.f32.gmra.mrb[0].mxu0 %v73
      %v146 = vpop.f32.mrb[0].mxu0
      %v147 = vadd.f32 0.0, %v146
      %v148 = vpop.f32.mrb[0].mxu0
      %149 = vdwg.mxu0
      %v150 = vpack.c.bf16 %v142, %v142
      %v151 = vpack.c.bf16 %v147, %v147
      %152 = vst [vmem:[#allocation2] sm:$0xf] %v150
      %153 = vst [vmem:[#allocation2 + $0x4] sm:$0xf] %v151
    $region33: #{tpu_custom_call.1} parent=1 // pred_fallthru
      _
    %v154 = vld [vmem:[#allocation6] sm:$0xf]
    %v155 = vld [vmem:[#allocation6 + $0x4] sm:$0xf]
    %v156 = vld [vmem:[#allocation2] sm:$0xf]
    %v157 = vld [vmem:[#allocation2 + $0x4] sm:$0xf]
    %v158 = vld [vmem:[%s3] sm:$0x1]
    %v160 = vlaneseq
    %v161 = vshrl.u32 %v160, 7
    %v162 = vsub.s32 0, %v161
    %v163 = vrot.slane %v158, %v162
    %vm165 = vcmask 64512
    %v167 = vsel %vm165, %v154, 0
    %vm169 = vcmask 1043456
    %v171 = vsel %vm169, %v156, 0
    %173 = vmatprep.subr.bf16.mxu0 0
    %174 = vmatpush1.bf16.msra.mxu0 %v171
    %175 = vmatprep.subr.bf16.mxu0 0
    %176 = vmatpush1.bf16.msra.mxu0 0
    %177 = vmatprep.subr.bf16.mxu0 0
    %178 = vmatpush1.bf16.msra.mxu0 0
    %179 = vmatprep.subr.bf16.mxu0 0
    %180 = vmatpush1.bf16.msra.mxu0 0
    %181 = vmatprep.subr.bf16.mxu0 0
    %182 = vmatpush1.bf16.msra.mxu0 0
    %183 = vmatprep.subr.bf16.mxu0 0
    %184 = vmatpush1.bf16.msra.mxu0 0
    %185 = vmatprep.subr.bf16.mxu0 0
    %186 = vmatpush1.bf16.msra.mxu0 0
    %187 = vmatprep.subr.bf16.mxu0 0
    %188 = vmatpush1.bf16.msra.mxu0 0
    %189 = vmatprep.subr.bf16.mxu0 0
    %190 = vmatpush1.bf16.msra.mxu0 0
    %191 = vmatprep.subr.bf16.mxu0 0
    %192 = vmatpush1.bf16.msra.mxu0 0
    %193 = vmatprep.subr.bf16.mxu0 0
    %194 = vmatpush1.bf16.msra.mxu0 0
    %195 = vmatprep.subr.bf16.mxu0 0
    %196 = vmatpush1.bf16.msra.mxu0 0
    %197 = vmatprep.subr.bf16.mxu0 0
    %198 = vmatpush1.bf16.msra.mxu0 0
    %199 = vmatprep.subr.bf16.mxu0 0
    %200 = vmatpush1.bf16.msra.mxu0 0
    %201 = vmatprep.subr.bf16.mxu0 0
    %202 = vmatpush1.bf16.msra.mxu0 0
    %203 = vmatprep.subr.bf16.mxu0 0
    %204 = vmatpush1.bf16.msra.mxu0 0
    %205 = vmatprep.mubr.bf16.mxu0 0
    %206 = vmatmul.mubr.bf16.gmra.mrb[0].mxu0 %v167
    %v207 = vpop.f32.mrb[0].mxu0
    %v208 = vadd.f32 %v163, %v207
    %v209 = vpop.f32.mrb[0].mxu0
    %v210 = vpop.f32.mrb[0].mxu0
    %v211 = vpop.f32.mrb[0].mxu0
    %212 = vdwg.mxu0
    %v214 = vsel %vm165, %v155, 0
    %v217 = vsel %vm169, %v157, 0
    %219 = vmatprep.subr.bf16.mxu0 0
    %220 = vmatpush1.bf16.msra.mxu0 %v217
    %221 = vmatprep.subr.bf16.mxu0 0
    %222 = vmatpush1.bf16.msra.mxu0 0
    %223 = vmatprep.subr.bf16.mxu0 0
    %224 = vmatpush1.bf16.msra.mxu0 0
    %225 = vmatprep.subr.bf16.mxu0 0
    %226 = vmatpush1.bf16.msra.mxu0 0
    %227 = vmatprep.subr.bf16.mxu0 0
    %228 = vmatpush1.bf16.msra.mxu0 0
    %229 = vmatprep.subr.bf16.mxu0 0
    %230 = vmatpush1.bf16.msra.mxu0 0
    %231 = vmatprep.subr.bf16.mxu0 0
    %232 = vmatpush1.bf16.msra.mxu0 0
    %233 = vmatprep.subr.bf16.mxu0 0
    %234 = vmatpush1.bf16.msra.mxu0 0
    %235 = vmatprep.subr.bf16.mxu0 0
    %236 = vmatpush1.bf16.msra.mxu0 0
    %237 = vmatprep.subr.bf16.mxu0 0
    %238 = vmatpush1.bf16.msra.mxu0 0
    %239 = vmatprep.subr.bf16.mxu0 0
    %240 = vmatpush1.bf16.msra.mxu0 0
    %241 = vmatprep.subr.bf16.mxu0 0
    %242 = vmatpush1.bf16.msra.mxu0 0
    %243 = vmatprep.subr.bf16.mxu0 0
    %244 = vmatpush1.bf16.msra.mxu0 0
    %245 = vmatprep.subr.bf16.mxu0 0
    %246 = vmatpush1.bf16.msra.mxu0 0
    %247 = vmatprep.subr.bf16.mxu0 0
    %248 = vmatpush1.bf16.msra.mxu0 0
    %249 = vmatprep.subr.bf16.mxu0 0
    %250 = vmatpush1.bf16.msra.mxu0 0
    %251 = vmatprep.mubr.bf16.mxu0 0
    %252 = vmatmul.mubr.bf16.gmra.mrb[0].mxu0 %v214
    %v253 = vpop.f32.mrb[0].mxu0
    %v254 = vadd.f32 %v163, %v253
    %v255 = vpop.f32.mrb[0].mxu0
    %v256 = vpop.f32.mrb[0].mxu0
    %v257 = vpop.f32.mrb[0].mxu0
    %258 = vdwg.mxu0
    %259 = vst [vmem:[#allocation9] sm:$0xff] %v208
    %260 = vst [vmem:[#allocation9 + $0x8] sm:$0xff] %v254
    // Predicated region
    $region34: #{tpu_custom_call.1} parent=1 // pred_check
      _
    $region35: #{tpu_custom_call.1} parent=1 // pred_check_branch
      %262 = sbr.rel (0) target = $region37
    $region36: #{tpu_custom_call.1} parent=1 // pred_region
      %s264 = ssub.s32 256, 256
      %265 = vsyncadd [#allocation5], %s264
      %s266 = sshll.u32 [#allocation9], 4
      %s267 = int_to_ptr.vmem [resolvable:$true] %s266
      %272 = dma.vmem_to_hbm [thread:$0]  %s267, 256, %s4, [#allocation5], 128, 128, 8
    $region37: #{tpu_custom_call.1} parent=1 // pred_fallthru
      _
    // Predicated region
    $region38: #{tpu_custom_call.1} parent=1 // pred_check
      _
    $region39: #{tpu_custom_call.1} parent=1 // pred_check_branch
      %274 = sbr.rel (0) target = $region41
    $region40: #{tpu_custom_call.1} parent=1 // pred_region
      %275 = dma.done [#allocation5], 256
    $region41: #{tpu_custom_call.1} parent=1 // pred_fallthru
      _
    %276 = vsyncpa [#allocation4], 1
    %277 = vsyncpa [#allocation7], 1
    %278 = vsyncpa [#allocation5], 1

</llo_original>
